<compile_context>
chip_gen: v7x
topology: tpu7x:2x2x1
jax: 0.10.0
libtpu: 0.0.40
codegen_flags: <defaults>
</compile_context>

<pallas_src>
import math

import jax
import jax.numpy as jnp
from jax.experimental import pallas as pl
from jax.experimental.pallas import tpu as pltpu


def make_mha_kernel(tq, embed_dim, num_heads):
    head_dim = embed_dim // num_heads
    # Contract the last dim of both operands: q (tq, hd) . k (S, hd) -> (tq, S)
    dn = (((1,), (1,)), ((), ()))

    def kernel(x_ref, wq_ref, bq_ref, wkv_ref, bkv_ref, wo_ref, bo_ref,
               o_ref, kv_sc, ho_sc):
        t = pl.program_id(1)

        # K/V projection hoisted out of the query-tile loop: computed once per
        # batch (query-tile 0) and kept in bf16 VMEM scratch, which persists
        # across the sequential ("arbitrary") query-tile axis.
        @pl.when(t == 0)
        def _():
            # TODO(synk): for very large S*E, chunk this cast (and tile K/V
            # with an online/flash softmax over a K/V grid axis) to bound the
            # transient f32 buffer and fit v7x's 64 MiB VMEM.
            kv = jnp.dot(x_ref[...], wkv_ref[...],
                         preferred_element_type=jnp.float32) + bkv_ref[...]
            kv_sc[...] = kv.astype(jnp.bfloat16)

        # Q projection for this tile only; query rows are sliced from the
        # resident full-sequence block (no separate query-tile DMA).
        # 1/sqrt(head_dim) is pre-folded into wq / bq.
        row0 = pl.multiple_of(t * tq, tq)
        xq = x_ref[pl.ds(row0, tq), :]
        q = (jnp.dot(xq, wq_ref[...], preferred_element_type=jnp.float32)
             + bq_ref[...]).astype(jnp.bfloat16)

        # Per-head attention.  Head outputs are staged at their lane offset so
        # the output projection is a single full-width (K=E) MXU matmul.
        # TODO(synk): for num_heads >= 16 switch to lax.fori_loop over heads
        # (pl.ds head slices) to bound vreg live ranges; static unroll kept
        # for small H.
        for h in range(num_heads):
            lo = h * head_dim
            qh = q[:, lo:lo + head_dim]
            kh = kv_sc[:, lo:lo + head_dim]
            vh = kv_sc[:, embed_dim + lo:embed_dim + lo + head_dim]

            # q @ k^T via dimension numbers (no materialized transpose).
            s = jax.lax.dot_general(qh, kh, dn,
                                    preferred_element_type=jnp.float32)
            m = jnp.max(s, axis=-1, keepdims=True)
            e = jnp.exp(s - m)   # f32 exp (bf16 EUP exp trades accuracy)
            inv = pl.reciprocal(jnp.sum(e, axis=-1, keepdims=True), approx=True)
            attn = (e * inv).astype(jnp.bfloat16)
            # TODO(synk): nn.Dropout(p=0.1) on attention omitted (eval-mode
            # semantics); attention mask / return_attention not supported.

            ho = jnp.dot(attn, vh, preferred_element_type=jnp.float32)
            ho_sc[:, lo:lo + head_dim] = ho.astype(jnp.bfloat16)

        # Single full-width output projection with bias.
        o = jnp.dot(ho_sc[...], wo_ref[...],
                    preferred_element_type=jnp.float32) + bo_ref[...]
        o_ref[...] = o.astype(o_ref.dtype)

    return kernel


def _device_kind():
    try:
        return jax.devices()[0].device_kind.lower()
    except Exception:
        return ""


def _pick_tq(seq_len):
    kind = _device_kind()
    # v5e's MXU is 128 rows high -> tq=128; v6e/v7x have 256-high MXUs -> 256.
    prefer = [128, 256] if ("v5 lite" in kind or "v5e" in kind) else [256, 128]
    for cand in prefer:
        if seq_len >= cand and seq_len % cand == 0:
            return cand
    return seq_len


def _vmem_limit_bytes(seq_len, embed_dim, tq):
    bf, f32 = 2, 4
    S, E = seq_len, embed_dim
    need = 0
    need += 2 * S * E * bf                          # full-seq x block (2-buffered)
    need += 2 * (4 * E * E * bf + 4 * E * f32)      # Wq/Wkv/Wo + biases (2-buffered)
    need += S * 2 * E * bf                          # persistent K|V scratch
    need += tq * E * bf                             # staged head outputs
    need += 2 * tq * E * f32                        # output block (2-buffered)
    need += S * 2 * E * f32                         # transient f32 K|V projection
    need += 4 * tq * S * f32 + 4 * tq * E * f32     # scores / exp / q / o temps
    kind = _device_kind()
    # v5e/v6e have 128 MiB physical VMEM; stay conservative (48 MiB) otherwise
    # (v7x has only 64 MiB).
    cap = (100 << 20) if ("v5" in kind or "v6" in kind) else (48 << 20)
    return max(min(int(1.5 * need), cap), 32 << 20)


def multihead_attention(x, w_qkv, b_qkv, w_o, b_o, num_heads):
    """x: (B, S, E) float32; weights in torch.nn.Linear (out, in) convention.
    Returns (B, S, E) float32 (eval-mode forward of the PyTorch module)."""
    B, S, E = x.shape
    H = num_heads
    assert E % H == 0, "embed_dim must be divisible by num_heads"
    hd = E // H
    scale = 1.0 / math.sqrt(hd)

    tq = _pick_tq(S)
    nq = S // tq

    # --- wrapper-side layout plumbing (no in-kernel transposes) -----------
    # qkv_proj output columns are laid out per head as [q_h | k_h | v_h];
    # regroup the (3E, E) weight rows head-major into all-q / all-k / all-v.
    idx = jnp.arange(3 * E).reshape(H, 3, hd)
    q_idx = idx[:, 0, :].reshape(-1)
    k_idx = idx[:, 1, :].reshape(-1)
    v_idx = idx[:, 2, :].reshape(-1)

    # Pre-transposed (E_in, E_out) weights; softmax scale folded into Wq / bq.
    w_q = (w_qkv[q_idx, :].T * scale).astype(jnp.bfloat16)            # (E, E)
    b_q = (b_qkv[q_idx] * scale).reshape(1, E).astype(jnp.float32)
    # K and V fused into one (E, 2E) projection weight.
    w_kv = jnp.concatenate([w_qkv[k_idx, :].T, w_qkv[v_idx, :].T],
                           axis=1).astype(jnp.bfloat16)               # (E, 2E)
    b_kv = jnp.concatenate([b_qkv[k_idx], b_qkv[v_idx]]).reshape(
        1, 2 * E).astype(jnp.float32)
    w_o_t = w_o.T.astype(jnp.bfloat16)                                # (E, E)
    b_o2 = b_o.reshape(1, E).astype(jnp.float32)

    x_bf = x.astype(jnp.bfloat16)

    kernel = make_mha_kernel(tq, E, H)

    return pl.pallas_call(
        kernel,
        out_shape=jax.ShapeDtypeStruct((B, S, E), x.dtype),
        grid_spec=pltpu.PrefetchScalarGridSpec(
            num_scalar_prefetch=0,
            grid=(B, nq),
            in_specs=[
                # Full sequence of batch b; only re-DMA'd when b changes.
                pl.BlockSpec((None, S, E), lambda b, t: (b, 0, 0)),
                pl.BlockSpec((E, E), lambda b, t: (0, 0)),        # Wq (scaled)
                pl.BlockSpec((1, E), lambda b, t: (0, 0)),        # bq (scaled)
                pl.BlockSpec((E, 2 * E), lambda b, t: (0, 0)),    # [Wk | Wv]
                pl.BlockSpec((1, 2 * E), lambda b, t: (0, 0)),    # [bk | bv]
                pl.BlockSpec((E, E), lambda b, t: (0, 0)),        # Wo^T
                pl.BlockSpec((1, E), lambda b, t: (0, 0)),        # bo
            ],
            out_specs=pl.BlockSpec((None, tq, E), lambda b, t: (b, t, 0)),
            scratch_shapes=[
                pltpu.VMEM((S, 2 * E), jnp.bfloat16),   # persistent K | V
                pltpu.VMEM((tq, E), jnp.bfloat16),      # staged head outputs
            ],
        ),
        compiler_params=pltpu.CompilerParams(
            # batch is megacore-parallel; the query-tile axis is sequential so
            # the K/V scratch written at tile 0 is valid for later tiles.
            dimension_semantics=("parallel", "arbitrary"),
            vmem_limit_bytes=_vmem_limit_bytes(S, E, tq)),
    )(x_bf, w_q, b_q, w_kv, b_kv, w_o_t, b_o2)


def reference_mha(x, w_qkv, b_qkv, w_o, b_o, num_heads):
    """Plain-JAX f32 reference mirroring the PyTorch forward (eval mode)."""
    B, S, E = x.shape
    hd = E // num_heads
    qkv = jnp.einsum("bse,oe->bso", x, w_qkv) + b_qkv
    qkv = qkv.reshape(B, S, num_heads, 3 * hd).transpose(0, 2, 1, 3)
    q, k, v = qkv[..., :hd], qkv[..., hd:2 * hd], qkv[..., 2 * hd:]
    logits = jnp.einsum("bhqd,bhkd->bhqk", q, k) / math.sqrt(hd)
    attn = jax.nn.softmax(logits, axis=-1)
    vals = jnp.einsum("bhqk,bhkd->bhqd", attn, v)
    vals = vals.transpose(0, 2, 1, 3).reshape(B, S, E)
    return jnp.einsum("bse,oe->bso", vals, w_o) + b_o


def xavier_uniform(key, shape):
    fan_out, fan_in = shape
    bound = math.sqrt(6.0 / (fan_in + fan_out))
    return jax.random.uniform(key, shape, jnp.float32, -bound, bound)


if __name__ == "__main__":
    B, S, E, H = 2, 8, 32, 4

    key = jax.random.PRNGKey(0)
    kx, kqkv, ko = jax.random.split(key, 3)

    x = jax.random.normal(kx, (B, S, E), jnp.float32)
    w_qkv = xavier_uniform(kqkv, (3 * E, E))     # qkv_proj.weight
    b_qkv = jnp.zeros((3 * E,), jnp.float32)     # qkv_proj.bias (fill 0)
    w_o = xavier_uniform(ko, (E, E))             # o_proj.weight
    b_o = jnp.zeros((E,), jnp.float32)           # o_proj.bias (fill 0)

    out = multihead_attention(x, w_qkv, b_qkv, w_o, b_o, H)
    out = jax.block_until_ready(out)

    ref = reference_mha(x, w_qkv, b_qkv, w_o, b_o, H)
    assert out.shape == (B, S, E)
    # bf16 matmul inputs (f32 accumulation) -> loosened tolerance vs f32 ref.
    assert jnp.allclose(out, ref, atol=5e-2, rtol=5e-2), "mismatch vs reference"

    print("KERNEL_OK")
</pallas_src>

<mosaic_0001>
module attributes {stable_mosaic.version = 11 : i64} {
  func.func @kernel(%arg0: i32, %arg1: i32, %arg2: memref<1x8x32xbf16, #tpu.memory_space<vmem>>, %arg3: memref<32x32xbf16, #tpu.memory_space<vmem>>, %arg4: memref<1x32xf32, #tpu.memory_space<vmem>>, %arg5: memref<32x64xbf16, #tpu.memory_space<vmem>>, %arg6: memref<1x64xf32, #tpu.memory_space<vmem>>, %arg7: memref<32x32xbf16, #tpu.memory_space<vmem>>, %arg8: memref<1x32xf32, #tpu.memory_space<vmem>>, %arg9: memref<1x8x32xf32, #tpu.memory_space<vmem>>, %arg10: memref<8x64xbf16, #tpu.memory_space<vmem>>, %arg11: memref<8x32xbf16, #tpu.memory_space<vmem>>) attributes {dimension_semantics = [#tpu.dimension_semantics<parallel>, #tpu.dimension_semantics<arbitrary>], iteration_bounds = array<i64: 2, 1>, scalar_prefetch = 0 : i64, scratch_operands = 2 : i64, tpu.core_type = #tpu.core_type<tc>, window_params = [{transform_indices = @transform_0, window_bounds = array<i64: 1, 8, 32>}, {pipeline_mode = #tpu.pipeline_mode<synchronous>, transform_indices = @transform_1, window_bounds = array<i64: 32, 32>}, {pipeline_mode = #tpu.pipeline_mode<synchronous>, transform_indices = @transform_2, window_bounds = array<i64: 1, 32>}, {pipeline_mode = #tpu.pipeline_mode<synchronous>, transform_indices = @transform_3, window_bounds = array<i64: 32, 64>}, {pipeline_mode = #tpu.pipeline_mode<synchronous>, transform_indices = @transform_4, window_bounds = array<i64: 1, 64>}, {pipeline_mode = #tpu.pipeline_mode<synchronous>, transform_indices = @transform_5, window_bounds = array<i64: 32, 32>}, {pipeline_mode = #tpu.pipeline_mode<synchronous>, transform_indices = @transform_6, window_bounds = array<i64: 1, 32>}, {transform_indices = @transform_7, window_bounds = array<i64: 1, 8, 32>}]} {
    %c0_i32 = arith.constant 0 : i32
    %0 = arith.cmpi eq, %arg1, %c0_i32 : i32
    %1 = arith.extui %0 : i1 to i32
    %c0_i32_0 = arith.constant 0 : i32
    %2 = arith.cmpi ne, %1, %c0_i32_0 : i32
    scf.if %2 {
      %c0_49 = arith.constant 0 : index
      %c0_50 = arith.constant 0 : index
      %c0_51 = arith.constant 0 : index
      %95 = vector.load %arg2[%c0_49, %c0_50, %c0_51] : memref<1x8x32xbf16, #tpu.memory_space<vmem>>, vector<1x8x32xbf16>
      %96 = vector.shape_cast %95 : vector<1x8x32xbf16> to vector<8x32xbf16>
      %c0_52 = arith.constant 0 : index
      %c0_53 = arith.constant 0 : index
      %97 = vector.load %arg5[%c0_52, %c0_53] : memref<32x64xbf16, #tpu.memory_space<vmem>>, vector<32x64xbf16>
      %cst_54 = arith.constant dense<0.000000e+00> : vector<8x64xf32>
      %98 = tpu.matmul %96, %97, %cst_54 {dimension_numbers = #tpu.dot_dimension_numbers<[1], [0], [0], [1], [0, 0, 1, 1], [], []>} : vector<8x32xbf16>, vector<32x64xbf16>, vector<8x64xf32> -> vector<8x64xf32>
      %c0_55 = arith.constant 0 : index
      %c0_56 = arith.constant 0 : index
      %99 = vector.load %arg6[%c0_55, %c0_56] : memref<1x64xf32, #tpu.memory_space<vmem>>, vector<1x64xf32>
      %100 = vector.broadcast %99 : vector<1x64xf32> to vector<8x64xf32>
      %101 = arith.addf %98, %100 : vector<8x64xf32>
      %102 = arith.truncf %101 : vector<8x64xf32> to vector<8x64xbf16>
      %c0_57 = arith.constant 0 : index
      %c0_58 = arith.constant 0 : index
      %103 = vector.load %arg10[%c0_57, %c0_58] : memref<8x64xbf16, #tpu.memory_space<vmem>>, vector<8x64xbf16>
      tpu.vector_store %arg10[%c0_57, %c0_58], %102 {strides = array<i32>} : memref<8x64xbf16, #tpu.memory_space<vmem>>, vector<8x64xbf16>,
    } else {
    }
    %c8_i32 = arith.constant 8 : i32
    %3 = arith.muli %arg1, %c8_i32 : i32
    %4 = tpu.assume_multiple %3, 8 : i32
    %c0 = arith.constant 0 : index
    %5 = arith.index_cast %4 : i32 to index
    %c0_1 = arith.constant 0 : index
    %6 = vector.load %arg2[%c0, %5, %c0_1] : memref<1x8x32xbf16, #tpu.memory_space<vmem>>, vector<1x8x32xbf16>
    %7 = vector.shape_cast %6 : vector<1x8x32xbf16> to vector<8x32xbf16>
    %c0_2 = arith.constant 0 : index
    %c0_3 = arith.constant 0 : index
    %8 = vector.load %arg3[%c0_2, %c0_3] : memref<32x32xbf16, #tpu.memory_space<vmem>>, vector<32x32xbf16>
    %cst = arith.constant dense<0.000000e+00> : vector<8x32xf32>
    %9 = tpu.matmul %7, %8, %cst {dimension_numbers = #tpu.dot_dimension_numbers<[1], [0], [0], [1], [0, 0, 1, 1], [], []>} : vector<8x32xbf16>, vector<32x32xbf16>, vector<8x32xf32> -> vector<8x32xf32>
    %c0_4 = arith.constant 0 : index
    %c0_5 = arith.constant 0 : index
    %10 = vector.load %arg4[%c0_4, %c0_5] : memref<1x32xf32, #tpu.memory_space<vmem>>, vector<1x32xf32>
    %11 = vector.broadcast %10 : vector<1x32xf32> to vector<8x32xf32>
    %12 = arith.addf %9, %11 : vector<8x32xf32>
    %13 = arith.truncf %12 : vector<8x32xf32> to vector<8x32xbf16>
    %14 = vector.extract_strided_slice %13 {offsets = [0, 0], sizes = [8, 8], strides = [1, 1]} : vector<8x32xbf16> to vector<8x8xbf16>
    %c0_6 = arith.constant 0 : index
    %c0_7 = arith.constant 0 : index
    %15 = vector.load %arg10[%c0_6, %c0_7] : memref<8x64xbf16, #tpu.memory_space<vmem>>, vector<8x8xbf16>
    %c0_8 = arith.constant 0 : index
    %c32 = arith.constant 32 : index
    %16 = vector.load %arg10[%c0_8, %c32] : memref<8x64xbf16, #tpu.memory_space<vmem>>, vector<8x8xbf16>
    %cst_9 = arith.constant dense<0.000000e+00> : vector<8x8xf32>
    %17 = tpu.matmul %14, %15, %cst_9 {dimension_numbers = #tpu.dot_dimension_numbers<[1], [1], [0], [0], [0, 0, 1, 0], [], []>} : vector<8x8xbf16>, vector<8x8xbf16>, vector<8x8xf32> -> vector<8x8xf32>
    %cst_10 = arith.constant dense<0xFF800000> : vector<8xf32>
    %18 = vector.multi_reduction <maximumf>, %17, %cst_10 [1] : vector<8x8xf32> to vector<8xf32>
    %19 = vector.shape_cast %18 : vector<8xf32> to vector<8x1xf32>
    %20 = vector.broadcast %19 : vector<8x1xf32> to vector<8x8xf32>
    %21 = arith.subf %17, %20 : vector<8x8xf32>
    %22 = math.exp %21 : vector<8x8xf32>
    %cst_11 = arith.constant dense<0.000000e+00> : vector<8xf32>
    %23 = vector.multi_reduction <add>, %22, %cst_11 [1] : vector<8x8xf32> to vector<8xf32>
    %24 = vector.shape_cast %23 : vector<8xf32> to vector<8x1xf32>
    %25 = tpu.reciprocal %24 {approx = true} : vector<8x1xf32> -> vector<8x1xf32>
    %26 = vector.broadcast %25 : vector<8x1xf32> to vector<8x8xf32>
    %27 = arith.mulf %22, %26 : vector<8x8xf32>
    %28 = arith.truncf %27 : vector<8x8xf32> to vector<8x8xbf16>
    %cst_12 = arith.constant dense<0.000000e+00> : vector<8x8xf32>
    %29 = tpu.matmul %28, %16, %cst_12 {dimension_numbers = #tpu.dot_dimension_numbers<[1], [0], [0], [1], [0, 0, 1, 1], [], []>} : vector<8x8xbf16>, vector<8x8xbf16>, vector<8x8xf32> -> vector<8x8xf32>
    %30 = arith.truncf %29 : vector<8x8xf32> to vector<8x8xbf16>
    %c0_13 = arith.constant 0 : index
    %c0_14 = arith.constant 0 : index
    %31 = vector.load %arg11[%c0_13, %c0_14] : memref<8x32xbf16, #tpu.memory_space<vmem>>, vector<8x8xbf16>
    tpu.vector_store %arg11[%c0_13, %c0_14], %30 {strides = array<i32>} : memref<8x32xbf16, #tpu.memory_space<vmem>>, vector<8x8xbf16>,
    %32 = vector.extract_strided_slice %13 {offsets = [0, 8], sizes = [8, 8], strides = [1, 1]} : vector<8x32xbf16> to vector<8x8xbf16>
    %c0_15 = arith.constant 0 : index
    %c8 = arith.constant 8 : index
    %33 = vector.load %arg10[%c0_15, %c8] : memref<8x64xbf16, #tpu.memory_space<vmem>>, vector<8x8xbf16>
    %c0_16 = arith.constant 0 : index
    %c40 = arith.constant 40 : index
    %34 = vector.load %arg10[%c0_16, %c40] : memref<8x64xbf16, #tpu.memory_space<vmem>>, vector<8x8xbf16>
    %cst_17 = arith.constant dense<0.000000e+00> : vector<8x8xf32>
    %35 = tpu.matmul %32, %33, %cst_17 {dimension_numbers = #tpu.dot_dimension_numbers<[1], [1], [0], [0], [0, 0, 1, 0], [], []>} : vector<8x8xbf16>, vector<8x8xbf16>, vector<8x8xf32> -> vector<8x8xf32>
    %cst_18 = arith.constant dense<0xFF800000> : vector<8xf32>
    %36 = vector.multi_reduction <maximumf>, %35, %cst_18 [1] : vector<8x8xf32> to vector<8xf32>
    %37 = vector.shape_cast %36 : vector<8xf32> to vector<8x1xf32>
    %38 = vector.broadcast %37 : vector<8x1xf32> to vector<8x8xf32>
    %39 = arith.subf %35, %38 : vector<8x8xf32>
    %40 = math.exp %39 : vector<8x8xf32>
    %cst_19 = arith.constant dense<0.000000e+00> : vector<8xf32>
    %41 = vector.multi_reduction <add>, %40, %cst_19 [1] : vector<8x8xf32> to vector<8xf32>
    %42 = vector.shape_cast %41 : vector<8xf32> to vector<8x1xf32>
    %43 = tpu.reciprocal %42 {approx = true} : vector<8x1xf32> -> vector<8x1xf32>
    %44 = vector.broadcast %43 : vector<8x1xf32> to vector<8x8xf32>
    %45 = arith.mulf %40, %44 : vector<8x8xf32>
    %46 = arith.truncf %45 : vector<8x8xf32> to vector<8x8xbf16>
    %cst_20 = arith.constant dense<0.000000e+00> : vector<8x8xf32>
    %47 = tpu.matmul %46, %34, %cst_20 {dimension_numbers = #tpu.dot_dimension_numbers<[1], [0], [0], [1], [0, 0, 1, 1], [], []>} : vector<8x8xbf16>, vector<8x8xbf16>, vector<8x8xf32> -> vector<8x8xf32>
    %48 = arith.truncf %47 : vector<8x8xf32> to vector<8x8xbf16>
    %c0_21 = arith.constant 0 : index
    %c8_22 = arith.constant 8 : index
    %49 = vector.load %arg11[%c0_21, %c8_22] : memref<8x32xbf16, #tpu.memory_space<vmem>>, vector<8x8xbf16>
    tpu.vector_store %arg11[%c0_21, %c8_22], %48 {strides = array<i32>} : memref<8x32xbf16, #tpu.memory_space<vmem>>, vector<8x8xbf16>,
    %50 = vector.extract_strided_slice %13 {offsets = [0, 16], sizes = [8, 8], strides = [1, 1]} : vector<8x32xbf16> to vector<8x8xbf16>
    %c0_23 = arith.constant 0 : index
    %c16 = arith.constant 16 : index
    %51 = vector.load %arg10[%c0_23, %c16] : memref<8x64xbf16, #tpu.memory_space<vmem>>, vector<8x8xbf16>
    %c0_24 = arith.constant 0 : index
    %c48 = arith.constant 48 : index
    %52 = vector.load %arg10[%c0_24, %c48] : memref<8x64xbf16, #tpu.memory_space<vmem>>, vector<8x8xbf16>
    %cst_25 = arith.constant dense<0.000000e+00> : vector<8x8xf32>
    %53 = tpu.matmul %50, %51, %cst_25 {dimension_numbers = #tpu.dot_dimension_numbers<[1], [1], [0], [0], [0, 0, 1, 0], [], []>} : vector<8x8xbf16>, vector<8x8xbf16>, vector<8x8xf32> -> vector<8x8xf32>
    %cst_26 = arith.constant dense<0xFF800000> : vector<8xf32>
    %54 = vector.multi_reduction <maximumf>, %53, %cst_26 [1] : vector<8x8xf32> to vector<8xf32>
    %55 = vector.shape_cast %54 : vector<8xf32> to vector<8x1xf32>
    %56 = vector.broadcast %55 : vector<8x1xf32> to vector<8x8xf32>
    %57 = arith.subf %53, %56 : vector<8x8xf32>
    %58 = math.exp %57 : vector<8x8xf32>
    %cst_27 = arith.constant dense<0.000000e+00> : vector<8xf32>
    %59 = vector.multi_reduction <add>, %58, %cst_27 [1] : vector<8x8xf32> to vector<8xf32>
    %60 = vector.shape_cast %59 : vector<8xf32> to vector<8x1xf32>
    %61 = tpu.reciprocal %60 {approx = true} : vector<8x1xf32> -> vector<8x1xf32>
    %62 = vector.broadcast %61 : vector<8x1xf32> to vector<8x8xf32>
    %63 = arith.mulf %58, %62 : vector<8x8xf32>
    %64 = arith.truncf %63 : vector<8x8xf32> to vector<8x8xbf16>
    %cst_28 = arith.constant dense<0.000000e+00> : vector<8x8xf32>
    %65 = tpu.matmul %64, %52, %cst_28 {dimension_numbers = #tpu.dot_dimension_numbers<[1], [0], [0], [1], [0, 0, 1, 1], [], []>} : vector<8x8xbf16>, vector<8x8xbf16>, vector<8x8xf32> -> vector<8x8xf32>
    %66 = arith.truncf %65 : vector<8x8xf32> to vector<8x8xbf16>
    %c0_29 = arith.constant 0 : index
    %c16_30 = arith.constant 16 : index
    %67 = vector.load %arg11[%c0_29, %c16_30] : memref<8x32xbf16, #tpu.memory_space<vmem>>, vector<8x8xbf16>
    tpu.vector_store %arg11[%c0_29, %c16_30], %66 {strides = array<i32>} : memref<8x32xbf16, #tpu.memory_space<vmem>>, vector<8x8xbf16>,
    %68 = vector.extract_strided_slice %13 {offsets = [0, 24], sizes = [8, 8], strides = [1, 1]} : vector<8x32xbf16> to vector<8x8xbf16>
    %c0_31 = arith.constant 0 : index
    %c24 = arith.constant 24 : index
    %69 = vector.load %arg10[%c0_31, %c24] : memref<8x64xbf16, #tpu.memory_space<vmem>>, vector<8x8xbf16>
    %c0_32 = arith.constant 0 : index
    %c56 = arith.constant 56 : index
    %70 = vector.load %arg10[%c0_32, %c56] : memref<8x64xbf16, #tpu.memory_space<vmem>>, vector<8x8xbf16>
    %cst_33 = arith.constant dense<0.000000e+00> : vector<8x8xf32>
    %71 = tpu.matmul %68, %69, %cst_33 {dimension_numbers = #tpu.dot_dimension_numbers<[1], [1], [0], [0], [0, 0, 1, 0], [], []>} : vector<8x8xbf16>, vector<8x8xbf16>, vector<8x8xf32> -> vector<8x8xf32>
    %cst_34 = arith.constant dense<0xFF800000> : vector<8xf32>
    %72 = vector.multi_reduction <maximumf>, %71, %cst_34 [1] : vector<8x8xf32> to vector<8xf32>
    %73 = vector.shape_cast %72 : vector<8xf32> to vector<8x1xf32>
    %74 = vector.broadcast %73 : vector<8x1xf32> to vector<8x8xf32>
    %75 = arith.subf %71, %74 : vector<8x8xf32>
    %76 = math.exp %75 : vector<8x8xf32>
    %cst_35 = arith.constant dense<0.000000e+00> : vector<8xf32>
    %77 = vector.multi_reduction <add>, %76, %cst_35 [1] : vector<8x8xf32> to vector<8xf32>
    %78 = vector.shape_cast %77 : vector<8xf32> to vector<8x1xf32>
    %79 = tpu.reciprocal %78 {approx = true} : vector<8x1xf32> -> vector<8x1xf32>
    %80 = vector.broadcast %79 : vector<8x1xf32> to vector<8x8xf32>
    %81 = arith.mulf %76, %80 : vector<8x8xf32>
    %82 = arith.truncf %81 : vector<8x8xf32> to vector<8x8xbf16>
    %cst_36 = arith.constant dense<0.000000e+00> : vector<8x8xf32>
    %83 = tpu.matmul %82, %70, %cst_36 {dimension_numbers = #tpu.dot_dimension_numbers<[1], [0], [0], [1], [0, 0, 1, 1], [], []>} : vector<8x8xbf16>, vector<8x8xbf16>, vector<8x8xf32> -> vector<8x8xf32>
    %84 = arith.truncf %83 : vector<8x8xf32> to vector<8x8xbf16>
    %c0_37 = arith.constant 0 : index
    %c24_38 = arith.constant 24 : index
    %85 = vector.load %arg11[%c0_37, %c24_38] : memref<8x32xbf16, #tpu.memory_space<vmem>>, vector<8x8xbf16>
    tpu.vector_store %arg11[%c0_37, %c24_38], %84 {strides = array<i32>} : memref<8x32xbf16, #tpu.memory_space<vmem>>, vector<8x8xbf16>,
    %c0_39 = arith.constant 0 : index
    %c0_40 = arith.constant 0 : index
    %86 = vector.load %arg11[%c0_39, %c0_40] : memref<8x32xbf16, #tpu.memory_space<vmem>>, vector<8x32xbf16>
    %c0_41 = arith.constant 0 : index
    %c0_42 = arith.constant 0 : index
    %87 = vector.load %arg7[%c0_41, %c0_42] : memref<32x32xbf16, #tpu.memory_space<vmem>>, vector<32x32xbf16>
    %cst_43 = arith.constant dense<0.000000e+00> : vector<8x32xf32>
    %88 = tpu.matmul %86, %87, %cst_43 {dimension_numbers = #tpu.dot_dimension_numbers<[1], [0], [0], [1], [0, 0, 1, 1], [], []>} : vector<8x32xbf16>, vector<32x32xbf16>, vector<8x32xf32> -> vector<8x32xf32>
    %c0_44 = arith.constant 0 : index
    %c0_45 = arith.constant 0 : index
    %89 = vector.load %arg8[%c0_44, %c0_45] : memref<1x32xf32, #tpu.memory_space<vmem>>, vector<1x32xf32>
    %90 = vector.broadcast %89 : vector<1x32xf32> to vector<8x32xf32>
    %91 = arith.addf %88, %90 : vector<8x32xf32>
    %c0_46 = arith.constant 0 : index
    %c0_47 = arith.constant 0 : index
    %c0_48 = arith.constant 0 : index
    %92 = vector.load %arg9[%c0_46, %c0_47, %c0_48] : memref<1x8x32xf32, #tpu.memory_space<vmem>>, vector<1x8x32xf32>
    %93 = vector.shape_cast %92 : vector<1x8x32xf32> to vector<8x32xf32>
    %94 = vector.shape_cast %91 : vector<8x32xf32> to vector<1x8x32xf32>
    tpu.vector_store %arg9[%c0_46, %c0_47, %c0_48], %94 {strides = array<i32>} : memref<1x8x32xf32, #tpu.memory_space<vmem>>, vector<1x8x32xf32>,
    return
  }
  func.func @transform_0(%arg0: i32, %arg1: i32) -> (i32, i32, i32) {
    %c0_i32 = arith.constant 0 : i32
    %c0_i32_0 = arith.constant 0 : i32
    %c0_i32_1 = arith.constant 0 : i32
    return %arg0, %c0_i32, %c0_i32_0 : i32, i32, i32
  }
  func.func @transform_1(%arg0: i32, %arg1: i32) -> (i32, i32) {
    %c0_i32 = arith.constant 0 : i32
    %c0_i32_0 = arith.constant 0 : i32
    %c0_i32_1 = arith.constant 0 : i32
    return %c0_i32, %c0_i32_0 : i32, i32
  }
  func.func @transform_2(%arg0: i32, %arg1: i32) -> (i32, i32) {
    %c0_i32 = arith.constant 0 : i32
    %c0_i32_0 = arith.constant 0 : i32
    %c0_i32_1 = arith.constant 0 : i32
    return %c0_i32, %c0_i32_0 : i32, i32
  }
  func.func @transform_3(%arg0: i32, %arg1: i32) -> (i32, i32) {
    %c0_i32 = arith.constant 0 : i32
    %c0_i32_0 = arith.constant 0 : i32
    %c0_i32_1 = arith.constant 0 : i32
    return %c0_i32, %c0_i32_0 : i32, i32
  }
  func.func @transform_4(%arg0: i32, %arg1: i32) -> (i32, i32) {
    %c0_i32 = arith.constant 0 : i32
    %c0_i32_0 = arith.constant 0 : i32
    %c0_i32_1 = arith.constant 0 : i32
    return %c0_i32, %c0_i32_0 : i32, i32
  }
  func.func @transform_5(%arg0: i32, %arg1: i32) -> (i32, i32) {
    %c0_i32 = arith.constant 0 : i32
    %c0_i32_0 = arith.constant 0 : i32
    %c0_i32_1 = arith.constant 0 : i32
    return %c0_i32, %c0_i32_0 : i32, i32
  }
  func.func @transform_6(%arg0: i32, %arg1: i32) -> (i32, i32) {
    %c0_i32 = arith.constant 0 : i32
    %c0_i32_0 = arith.constant 0 : i32
    %c0_i32_1 = arith.constant 0 : i32
    return %c0_i32, %c0_i32_0 : i32, i32
  }
  func.func @transform_7(%arg0: i32, %arg1: i32) -> (i32, i32, i32) {
    %c0_i32 = arith.constant 0 : i32
    %c0_i32_0 = arith.constant 0 : i32
    return %arg0, %arg1, %c0_i32 : i32, i32, i32
  }
}

</mosaic_0001>

<llo_original>
// kernel: tpu_custom_call.1
$region0: #{tpu_custom_call.1}
  #allocation0 [shape = 'u32[]', space=smem, size = 0x4, offset = 0x4, fixed_abs, tag = 'smem constant byte address 0x4 - core index']
  #allocation1 [shape = 'u32[144,128]{1,0:T(1,128)}', space=vmem, size = 0x12000, scoped, tag = 'internal scratch']
  #allocation2 [shape = 'bf16[8,64]{1,0:T(8,128)(2,1)}', space=vmem, size = 0x800, scoped, tag = 'scratch operand']
  #allocation3 [shape = 'bf16[8,32]{1,0:T(8,128)(2,1)}', space=vmem, size = 0x800, scoped, tag = 'scratch operand']
  %s0 = inlined_call_operand.hbm [shape: bf16[2,8,32], index: 0, kind: input, shape index: {}]
  %s1 = inlined_call_operand.hbm [shape: bf16[32,32], index: 1, kind: input, shape index: {}]
  %s2 = inlined_call_operand.vmem [shape: f32[1,32], index: 2, kind: input, shape index: {}]
  %s3 = inlined_call_operand.hbm [shape: bf16[32,64], index: 3, kind: input, shape index: {}]
  %s4 = inlined_call_operand.vmem [shape: f32[1,64], index: 4, kind: input, shape index: {}]
  %s5 = inlined_call_operand.vmem [shape: bf16[32,32], index: 5, kind: input, shape index: {}]
  %s6 = inlined_call_operand.vmem [shape: f32[1,32], index: 6, kind: input, shape index: {}]
  %s7 = inlined_call_operand.hbm [shape: f32[2,8,32], index: 7, kind: output, shape index: {}]
  %s8 = sld [smem:[#allocation0]]
  $region77: #{tpu_custom_call.1} parent=0
    _
  %s10 = ssub.s32 1, %s8
  %s11 = scalar_select 0, %s10, %s8
  $region1: #{tpu_custom_call.1} parent=0
    #allocation4 [shape = 'u8[4096]{0}', space=vmem, size = 0x1000, scoped, tag = 'input window, operand 0']
    #allocation5 [shape = 's32[2]{0}', space=sflag, size = 0x8, scoped, tag = 'scoped memory for tpu_custom_call.1']
    #allocation6 [shape = 's32[2]{0}', space=sflag, size = 0x8, scoped, tag = 'scoped memory for tpu_custom_call.1']
    #allocation7 [shape = 'u8[8192]{0}', space=vmem, size = 0x2000, scoped, tag = 'input window, operand 1, single buffered']
    #allocation8 [shape = 's32[1]{0}', space=sflag, size = 0x4, scoped, tag = 'scoped memory for tpu_custom_call.1']
    #allocation9 [shape = 'u8[8192]{0}', space=vmem, size = 0x2000, scoped, tag = 'input window, operand 3, single buffered']
    #allocation10 [shape = 'u8[8192]{0}', space=vmem, size = 0x2000, scoped, tag = 'output window, operand 0']
    %12 = vsyncpa [#allocation5], 0
    %s13 = scalar_lea.sflag [#allocation5], 1
    %14 = vsyncpa %s13, 0
    %15 = vsyncpa [#allocation8], 0
    %16 = vsyncpa [#allocation6], 0
    %s17 = scalar_lea.sflag [#allocation6], 1
    %18 = vsyncpa %s17, 0
    loop: start=0, step=1, limit=4
    $region2: #{tpu_custom_call.1} parent=1 // loop_pre_header
      _
    $region3: #{tpu_custom_call.1} parent=1 // loop_header
      %s20 = sphi 0, %s24
      %p21 = scmp.ge.s32.totalorder %s20, 4
      %s27 = sphi 0, %s39
      %s28 = sphi 0, %s35
      %s29 = sphi 0, %s27
      %s30 = sphi 0, %s28
      %s31 = sphi 0, %s29
      %s32 = sphi 0, %s30
      %s42 = sphi 0, %s44
      %s45 = sphi 0, %s42
      %s46 = sphi 0, %s45
      %s62 = sphi 0, %s46
      %s66 = sphi 0, %s66
      %s68 = sphi 0, %s66
      %s69 = sphi 0, %s68
      %s83 = sphi 0, %s69
      %s87 = sphi 0, %s87
      %s89 = sphi 0, %s87
      %s90 = sphi 0, %s89
      %s104 = sphi 0, %s90
      %s108 = sphi 0, %s108
      %s110 = sphi 0, %s108
      %s111 = sphi 0, %s110
      %s125 = sphi 0, %s111
      %s129 = sphi 0, %s129
      %s131 = sphi 0, %s129
      %s132 = sphi 0, %s131
      %s146 = sphi 0, %s132
      %s150 = sphi 0, %s150
      %s152 = sphi 0, %s150
      %s153 = sphi 0, %s152
      %s167 = sphi 0, %s153
      %s171 = sphi 0, %s171
      %s173 = sphi 0, %s171
      %s174 = sphi 0, %s173
      %s188 = sphi 0, %s174
      %s196 = sphi 0, %s198
      %s199 = sphi 0, %s196
      %s200 = sphi 0, %s199
      %s216 = sphi 0, %s200
    $region4: #{tpu_custom_call.1} parent=1 // loop_header_branch
      %23 = sbr.rel (%p21) target = $region8
    $region5: #{tpu_custom_call.1} parent=1 // loop_body
      %s25 = ssub.s32 %s20, 1
      %s26 = ssub.s32 %s20, 2
      %s33 = sadd.s32 1, %s28
      %p34 = scmp.ge.s32.totalorder %s33, 1
      %s35 = scalar_select %p34, 0, %s33
      %s36 = sadd.s32 1, %s27
      %s37 = scalar_select %p34, %s36, %s27
      %p38 = scmp.ge.s32.totalorder %s37, 2
      %s39 = scalar_select %p38, 0, %s37
      %s40 = ssub.s32 %s27, %s39
      %p41 = scmp.eq.s32.totalorder %s40, 0
      %s43 = sadd.s32 %s42, 1
      %s44 = scalar_select %p41, %s42, %s43
      %p47 = pneg %p41
      %p48 = scmp.eq.s32.totalorder %s20, 1
      %p49 = por %p47, %p48
      %p50 = scmp.ne.s32.totalorder %s42, %s45
      %p51 = scmp.eq.s32.totalorder %s20, 0
      %p52 = por %p50, %p51
      %p53 = scmp.ne.s32.totalorder %s42, %s45
      %p54 = scmp.eq.s32.totalorder %s25, 1
      %p55 = por %p53, %p54
      %p56 = scmp.ne.s32.totalorder %s45, %s46
      %p57 = scmp.eq.s32.totalorder %s25, 0
      %p58 = por %p56, %p57
      %p59 = scmp.ne.s32.totalorder %s45, %s46
      %p60 = scmp.eq.s32.totalorder %s26, 1
      %p61 = por %p59, %p60
      %p63 = scmp.ne.s32.totalorder %s46, %s62
      %p64 = scmp.eq.s32.totalorder %s26, 0
      %p65 = por %p63, %p64
      %s67 = sadd.s32 %s66, 1
      %p70 = scmp.eq.s32.totalorder %s20, 1
      %p71 = scmp.ne.s32.totalorder %s66, %s68
      %p72 = scmp.eq.s32.totalorder %s20, 0
      %p73 = por %p71, %p72
      %p74 = scmp.ne.s32.totalorder %s66, %s68
      %p75 = scmp.eq.s32.totalorder %s25, 1
      %p76 = por %p74, %p75
      %p77 = scmp.ne.s32.totalorder %s68, %s69
      %p78 = scmp.eq.s32.totalorder %s25, 0
      %p79 = por %p77, %p78
      %p80 = scmp.ne.s32.totalorder %s68, %s69
      %p81 = scmp.eq.s32.totalorder %s26, 1
      %p82 = por %p80, %p81
      %p84 = scmp.ne.s32.totalorder %s69, %s83
      %p85 = scmp.eq.s32.totalorder %s26, 0
      %p86 = por %p84, %p85
      %s88 = sadd.s32 %s87, 1
      %p91 = scmp.eq.s32.totalorder %s20, 1
      %p92 = scmp.ne.s32.totalorder %s87, %s89
      %p93 = scmp.eq.s32.totalorder %s20, 0
      %p94 = por %p92, %p93
      %p95 = scmp.ne.s32.totalorder %s87, %s89
      %p96 = scmp.eq.s32.totalorder %s25, 1
      %p97 = por %p95, %p96
      %p98 = scmp.ne.s32.totalorder %s89, %s90
      %p99 = scmp.eq.s32.totalorder %s25, 0
      %p100 = por %p98, %p99
      %p101 = scmp.ne.s32.totalorder %s89, %s90
      %p102 = scmp.eq.s32.totalorder %s26, 1
      %p103 = por %p101, %p102
      %p105 = scmp.ne.s32.totalorder %s90, %s104
      %p106 = scmp.eq.s32.totalorder %s26, 0
      %p107 = por %p105, %p106
      %s109 = sadd.s32 %s108, 1
      %p112 = scmp.eq.s32.totalorder %s20, 1
      %p113 = scmp.ne.s32.totalorder %s108, %s110
      %p114 = scmp.eq.s32.totalorder %s20, 0
      %p115 = por %p113, %p114
      %p116 = scmp.ne.s32.totalorder %s108, %s110
      %p117 = scmp.eq.s32.totalorder %s25, 1
      %p118 = por %p116, %p117
      %p119 = scmp.ne.s32.totalorder %s110, %s111
      %p120 = scmp.eq.s32.totalorder %s25, 0
      %p121 = por %p119, %p120
      %p122 = scmp.ne.s32.totalorder %s110, %s111
      %p123 = scmp.eq.s32.totalorder %s26, 1
      %p124 = por %p122, %p123
      %p126 = scmp.ne.s32.totalorder %s111, %s125
      %p127 = scmp.eq.s32.totalorder %s26, 0
      %p128 = por %p126, %p127
      %s130 = sadd.s32 %s129, 1
      %p133 = scmp.eq.s32.totalorder %s20, 1
      %p134 = scmp.ne.s32.totalorder %s129, %s131
      %p135 = scmp.eq.s32.totalorder %s20, 0
      %p136 = por %p134, %p135
      %p137 = scmp.ne.s32.totalorder %s129, %s131
      %p138 = scmp.eq.s32.totalorder %s25, 1
      %p139 = por %p137, %p138
      %p140 = scmp.ne.s32.totalorder %s131, %s132
      %p141 = scmp.eq.s32.totalorder %s25, 0
      %p142 = por %p140, %p141
      %p143 = scmp.ne.s32.totalorder %s131, %s132
      %p144 = scmp.eq.s32.totalorder %s26, 1
      %p145 = por %p143, %p144
      %p147 = scmp.ne.s32.totalorder %s132, %s146
      %p148 = scmp.eq.s32.totalorder %s26, 0
      %p149 = por %p147, %p148
      %s151 = sadd.s32 %s150, 1
      %p154 = scmp.eq.s32.totalorder %s20, 1
      %p155 = scmp.ne.s32.totalorder %s150, %s152
      %p156 = scmp.eq.s32.totalorder %s20, 0
      %p157 = por %p155, %p156
      %p158 = scmp.ne.s32.totalorder %s150, %s152
      %p159 = scmp.eq.s32.totalorder %s25, 1
      %p160 = por %p158, %p159
      %p161 = scmp.ne.s32.totalorder %s152, %s153
      %p162 = scmp.eq.s32.totalorder %s25, 0
      %p163 = por %p161, %p162
      %p164 = scmp.ne.s32.totalorder %s152, %s153
      %p165 = scmp.eq.s32.totalorder %s26, 1
      %p166 = por %p164, %p165
      %p168 = scmp.ne.s32.totalorder %s153, %s167
      %p169 = scmp.eq.s32.totalorder %s26, 0
      %p170 = por %p168, %p169
      %s172 = sadd.s32 %s171, 1
      %p175 = scmp.eq.s32.totalorder %s20, 1
      %p176 = scmp.ne.s32.totalorder %s171, %s173
      %p177 = scmp.eq.s32.totalorder %s20, 0
      %p178 = por %p176, %p177
      %p179 = scmp.ne.s32.totalorder %s171, %s173
      %p180 = scmp.eq.s32.totalorder %s25, 1
      %p181 = por %p179, %p180
      %p182 = scmp.ne.s32.totalorder %s173, %s174
      %p183 = scmp.eq.s32.totalorder %s25, 0
      %p184 = por %p182, %p183
      %p185 = scmp.ne.s32.totalorder %s173, %s174
      %p186 = scmp.eq.s32.totalorder %s26, 1
      %p187 = por %p185, %p186
      %p189 = scmp.ne.s32.totalorder %s174, %s188
      %p190 = scmp.eq.s32.totalorder %s26, 0
      %p191 = por %p189, %p190
      %s192 = ssub.s32 %s27, %s39
      %s193 = ssub.s32 %s28, %s35
      %s194 = sor.u32 %s192, %s193
      %p195 = scmp.eq.s32.totalorder %s194, 0
      %s197 = sadd.s32 %s196, 1
      %s198 = scalar_select %p195, %s196, %s197
      %p201 = pneg %p195
      %p202 = scmp.eq.s32.totalorder %s20, 1
      %p203 = por %p201, %p202
      %p204 = scmp.ne.s32.totalorder %s196, %s199
      %p205 = scmp.eq.s32.totalorder %s20, 0
      %p206 = por %p204, %p205
      %p207 = scmp.ne.s32.totalorder %s196, %s199
      %p208 = scmp.eq.s32.totalorder %s25, 1
      %p209 = por %p207, %p208
      %p210 = scmp.ne.s32.totalorder %s199, %s200
      %p211 = scmp.eq.s32.totalorder %s25, 0
      %p212 = por %p210, %p211
      %p213 = scmp.ne.s32.totalorder %s199, %s200
      %p214 = scmp.eq.s32.totalorder %s26, 1
      %p215 = por %p213, %p214
      %p217 = scmp.ne.s32.totalorder %s200, %s216
      %p218 = scmp.eq.s32.totalorder %s26, 0
      %p219 = por %p217, %p218
      %p220 = scmp.le.s32.totalorder 1, %s20
      %p221 = scmp.lt.s32.totalorder %s20, 3
      %p222 = pnand %p220, %p221
      %p223 = pneg %p222
      // Predicated region
      $region9: #{tpu_custom_call.1} parent=5 // pred_check
        _
      $region10: #{tpu_custom_call.1} parent=5 // pred_check_branch
        %225 = sbr.rel (%p222) target = $region12
      $region11: #{tpu_custom_call.1} parent=5 // pred_region
        %s226 = ssub.s32 %s20, 1
        // Predicated region
        $region13: #{tpu_custom_call.1} parent=11 // pred_check
          %p227 = pneg %p79
        $region14: #{tpu_custom_call.1} parent=11 // pred_check_branch
          %229 = sbr.rel (%p227) target = $region16
        $region15: #{tpu_custom_call.1} parent=11 // pred_region
          %s231 = ssub.s32 256, 256
          %232 = vsyncadd [#allocation8], %s231
          %s233 = sshll.u32 [#allocation7], 4
          %s234 = int_to_ptr.vmem [resolvable:$true] %s233
          %239 = dma.hbm_to_vmem [thread:$0]  %s1, 256, %s234, [#allocation8], 64, 64, 4
        $region16: #{tpu_custom_call.1} parent=11 // pred_fallthru
          _
        // Predicated region
        $region17: #{tpu_custom_call.1} parent=11 // pred_check
          %p240 = pneg %p100
        $region18: #{tpu_custom_call.1} parent=11 // pred_check_branch
          %242 = sbr.rel (%p240) target = $region20
        $region19: #{tpu_custom_call.1} parent=11 // pred_region
          _
        $region20: #{tpu_custom_call.1} parent=11 // pred_fallthru
          _
        // Predicated region
        $region21: #{tpu_custom_call.1} parent=11 // pred_check
          %p243 = pneg %p121
        $region22: #{tpu_custom_call.1} parent=11 // pred_check_branch
          %245 = sbr.rel (%p243) target = $region24
        $region23: #{tpu_custom_call.1} parent=11 // pred_region
          %s247 = ssub.s32 256, 256
          %248 = vsyncadd [#allocation8], %s247
          %s249 = sshll.u32 [#allocation9], 4
          %s250 = int_to_ptr.vmem [resolvable:$true] %s249
          %255 = dma.hbm_to_vmem [thread:$0]  %s3, 256, %s250, [#allocation8], 64, 64, 4
        $region24: #{tpu_custom_call.1} parent=11 // pred_fallthru
          _
        // Predicated region
        $region25: #{tpu_custom_call.1} parent=11 // pred_check
          %p256 = pneg %p142
        $region26: #{tpu_custom_call.1} parent=11 // pred_check_branch
          %258 = sbr.rel (%p256) target = $region28
        $region27: #{tpu_custom_call.1} parent=11 // pred_region
          _
        $region28: #{tpu_custom_call.1} parent=11 // pred_fallthru
          _
        // Predicated region
        $region29: #{tpu_custom_call.1} parent=11 // pred_check
          %p259 = pneg %p163
        $region30: #{tpu_custom_call.1} parent=11 // pred_check_branch
          %261 = sbr.rel (%p259) target = $region32
        $region31: #{tpu_custom_call.1} parent=11 // pred_region
          _
        $region32: #{tpu_custom_call.1} parent=11 // pred_fallthru
          _
        // Predicated region
        $region33: #{tpu_custom_call.1} parent=11 // pred_check
          %p262 = pneg %p184
        $region34: #{tpu_custom_call.1} parent=11 // pred_check_branch
          %264 = sbr.rel (%p262) target = $region36
        $region35: #{tpu_custom_call.1} parent=11 // pred_region
          _
        $region36: #{tpu_custom_call.1} parent=11 // pred_fallthru
          _
      $region12: #{tpu_custom_call.1} parent=5 // pred_fallthru
        _
      %p265 = scmp.lt.s32.totalorder %s20, 2
      // Predicated region
      $region37: #{tpu_custom_call.1} parent=5 // pred_check
        %p266 = pneg %p265
      $region38: #{tpu_custom_call.1} parent=5 // pred_check_branch
        %268 = sbr.rel (%p266) target = $region40
      $region39: #{tpu_custom_call.1} parent=5 // pred_region
        // Predicated region
        $region41: #{tpu_custom_call.1} parent=39 // pred_check
          %p269 = pneg %p52
        $region42: #{tpu_custom_call.1} parent=39 // pred_check_branch
          %271 = sbr.rel (%p269) target = $region44
        $region43: #{tpu_custom_call.1} parent=39 // pred_region
          %s272 = sand.u32 %s42, 1
          %s273 = scalar_lea.sflag [#allocation5], %s272
          %s274 = sand.u32 %s42, 1
          %s275 = smul.addr %s274, 4
          %s276 = scalar_lea.vmem [#allocation4], %s275
          %s278 = ssub.s32 64, 64
          %279 = vsyncadd %s273, %s278
          %s280 = smul.addr %s27, 64
          %s281 = scalar_lea.hbm %s0, %s280
          %s283 = sshll.u32 %s276, 4
          %s284 = int_to_ptr.vmem [resolvable:$true] %s283
          %286 = dma.hbm_to_vmem [thread:$0]  %s281, 64, %s284, %s273
        $region44: #{tpu_custom_call.1} parent=39 // pred_fallthru
          _
      $region40: #{tpu_custom_call.1} parent=5 // pred_fallthru
        _
      %p287 = scmp.le.s32.totalorder 1, %s20
      %p288 = scmp.lt.s32.totalorder %s20, 3
      %p289 = pnand %p287, %p288
      %p290 = pneg %p289
      // Predicated region
      $region45: #{tpu_custom_call.1} parent=5 // pred_check
        _
      $region46: #{tpu_custom_call.1} parent=5 // pred_check_branch
        %292 = sbr.rel (%p289) target = $region48
      $region47: #{tpu_custom_call.1} parent=5 // pred_region
        %s293 = ssub.s32 %s20, 1
        %s294 = sand.u32 %s45, 1
        %s295 = scalar_lea.sflag [#allocation5], %s294
        %s296 = sand.u32 %s45, 1
        %s297 = smul.addr %s296, 4
        %s298 = scalar_lea.vmem [#allocation4], %s297
        // Predicated region
        $region49: #{tpu_custom_call.1} parent=47 // pred_check
          %p299 = pneg %p58
        $region50: #{tpu_custom_call.1} parent=47 // pred_check_branch
          %301 = sbr.rel (%p299) target = $region52
        $region51: #{tpu_custom_call.1} parent=47 // pred_region
          %302 = dma.done %s295, 64
        $region52: #{tpu_custom_call.1} parent=47 // pred_fallthru
          _
        // Predicated region
        $region53: #{tpu_custom_call.1} parent=47 // pred_check
          %p303 = pneg %p79
        $region54: #{tpu_custom_call.1} parent=47 // pred_check_branch
          %305 = sbr.rel (%p303) target = $region56
        $region55: #{tpu_custom_call.1} parent=47 // pred_region
          %306 = dma.done [#allocation8], 256
        $region56: #{tpu_custom_call.1} parent=47 // pred_fallthru
          _
        // Predicated region
        $region57: #{tpu_custom_call.1} parent=47 // pred_check
          %p307 = pneg %p121
        $region58: #{tpu_custom_call.1} parent=47 // pred_check_branch
          %309 = sbr.rel (%p307) target = $region60
        $region59: #{tpu_custom_call.1} parent=47 // pred_region
          %310 = dma.done [#allocation8], 256
        $region60: #{tpu_custom_call.1} parent=47 // pred_fallthru
          _
        %s311 = sand.u32 %s45, 1
        %s312 = scalar_lea.sflag [#allocation5], %s311
        %s313 = sand.u32 %s45, 1
        %s314 = smul.addr %s313, 4
        %s315 = scalar_lea.vmem [#allocation4], %s314
        %p316 = pneg %p58
        %p317 = pneg %p55
        %p318 = pneg %p79
        %p319 = pneg %p76
        %p320 = pneg %p100
        %p321 = pneg %p97
        %p322 = pneg %p121
        %p323 = pneg %p118
        %p324 = pneg %p142
        %p325 = pneg %p139
        %p326 = pneg %p163
        %p327 = pneg %p160
        %p328 = pneg %p184
        %p329 = pneg %p181
        %p330 = pneg %p212
        %p331 = pneg %p209
        %s332 = sand.u32 %s199, 1
        %s333 = scalar_lea.sflag [#allocation6], %s332
        %s334 = sand.u32 %s199, 1
        %s335 = smul.addr %s334, 8
        %s336 = scalar_lea.vmem [#allocation10], %s335
        %p338 = scmp.eq.s32.totalorder %s30, 0
        // Predicated region
        $region61: #{tpu_custom_call.1} parent=47 // pred_check
          %p339 = pneg %p338
        $region62: #{tpu_custom_call.1} parent=47 // pred_check_branch
          %341 = sbr.rel (%p339) target = $region64
        $region63: #{tpu_custom_call.1} parent=47 // pred_region
          %v342 = vld [vmem:[%s298] sm:$0xf]
          %v343 = vld [vmem:[#allocation9] sm:$0xf]
          %v344 = vld [vmem:[#allocation9 + $0x4] sm:$0xf]
          %v345 = vld [vmem:[#allocation9 + $0x8] sm:$0xf]
          %v346 = vld [vmem:[#allocation9 + $0xc] sm:$0xf]
          %v347 = vld [vmem:[%s4] sm:$0x1]
          %v349 = vlaneseq
          %v350 = vshrl.u32 %v349, 7
          %v351 = vsub.s32 0, %v350
          %v352 = vrot.slane %v347, %v351
          %v358 = vunpack.c.l.b16 %v343
          %v359 = vunpack.c.l.b16 %v344
          %v360 = vunpack.c.l.b16 %v345
          %v361 = vunpack.c.l.b16 %v346
          %v362 = vpack.c.b16 %v359, %v358
          %v363 = vpack.c.b16 %v361, %v360
          %vm366 = vcmask 261120
          %v368 = vsel %vm366, %v342, 0
          %370 = vmatprep.subr.bf16.mxu0 0
          %371 = vmatpush1.bf16.msra.mxu0 %v362
          %372 = vmatprep.subr.bf16.mxu0 0
          %373 = vmatpush1.bf16.msra.mxu0 %v363
          %374 = vmatprep.subr.bf16.mxu0 0
          %375 = vmatpush1.bf16.msra.mxu0 0
          %376 = vmatprep.subr.bf16.mxu0 0
          %377 = vmatpush1.bf16.msra.mxu0 0
          %378 = vmatprep.subr.bf16.mxu0 0
          %379 = vmatpush1.bf16.msra.mxu0 0
          %380 = vmatprep.subr.bf16.mxu0 0
          %381 = vmatpush1.bf16.msra.mxu0 0
          %382 = vmatprep.subr.bf16.mxu0 0
          %383 = vmatpush1.bf16.msra.mxu0 0
          %384 = vmatprep.subr.bf16.mxu0 0
          %385 = vmatpush1.bf16.msra.mxu0 0
          %386 = vmatprep.subr.bf16.mxu0 0
          %387 = vmatpush1.bf16.msra.mxu0 0
          %388 = vmatprep.subr.bf16.mxu0 0
          %389 = vmatpush1.bf16.msra.mxu0 0
          %390 = vmatprep.subr.bf16.mxu0 0
          %391 = vmatpush1.bf16.msra.mxu0 0
          %392 = vmatprep.subr.bf16.mxu0 0
          %393 = vmatpush1.bf16.msra.mxu0 0
          %394 = vmatprep.subr.bf16.mxu0 0
          %395 = vmatpush1.bf16.msra.mxu0 0
          %396 = vmatprep.subr.bf16.mxu0 0
          %397 = vmatpush1.bf16.msra.mxu0 0
          %398 = vmatprep.subr.bf16.mxu0 0
          %399 = vmatpush1.bf16.msra.mxu0 0
          %400 = vmatprep.subr.bf16.mxu0 0
          %401 = vmatpush1.bf16.msra.mxu0 0
          %402 = vmatprep.mubr.bf16.mxu0 0
          %403 = vmatmul.mubr.bf16.gmra.mrb[0].mxu0 %v368
          %v404 = vpop.f32.mrb[0].mxu0
          %v405 = vadd.f32 %v352, %v404
          %v406 = vpop.f32.mrb[0].mxu0
          %v407 = vpop.f32.mrb[0].mxu0
          %v408 = vpop.f32.mrb[0].mxu0
          %409 = vdwg.mxu0
          %v410 = vpack.c.bf16 %v405, %v405
          %vm411 = vcmask 519168
          %412 = vst.msk [vmem:[#allocation2] sm:$0xf] %vm411, %v410
        $region64: #{tpu_custom_call.1} parent=47 // pred_fallthru
          _
        %s413 = smul.u32 %s30, 8
        %s414 = sshra.s32 %s413, 3
        %s415 = sand.u32 %s413, 7
        %s416 = smul.addr %s414, 4
        %s417 = scalar_lea.vmem %s298, %s416 [#allocation4]
        %v418 = vld [vmem:[%s417] sm:$0xf]
        %v419 = vld [vmem:[#allocation7] sm:$0xf]
        %v420 = vld [vmem:[#allocation7 + $0x4] sm:$0xf]
        %v421 = vld [vmem:[#allocation7 + $0x8] sm:$0xf]
        %v422 = vld [vmem:[#allocation7 + $0xc] sm:$0xf]
        %v423 = vld [vmem:[%s2] sm:$0x1]
        %v425 = vlaneseq
        %v426 = vshrl.u32 %v425, 7
        %v427 = vsub.s32 0, %v426
        %v428 = vrot.slane %v423, %v427
        %v434 = vunpack.c.l.b16 %v419
        %v435 = vunpack.c.l.b16 %v420
        %v436 = vunpack.c.l.b16 %v421
        %v437 = vunpack.c.l.b16 %v422
        %v438 = vpack.c.b16 %v435, %v434
        %v439 = vpack.c.b16 %v437, %v436
        %vm442 = vcmask 261120
        %v444 = vsel %vm442, %v418, 0
        %446 = vmatprep.subr.bf16.mxu0 0
        %447 = vmatpush1.bf16.msra.mxu0 %v438
        %448 = vmatprep.subr.bf16.mxu0 0
        %449 = vmatpush1.bf16.msra.mxu0 %v439
        %450 = vmatprep.subr.bf16.mxu0 0
        %451 = vmatpush1.bf16.msra.mxu0 0
        %452 = vmatprep.subr.bf16.mxu0 0
        %453 = vmatpush1.bf16.msra.mxu0 0
        %454 = vmatprep.subr.bf16.mxu0 0
        %455 = vmatpush1.bf16.msra.mxu0 0
        %456 = vmatprep.subr.bf16.mxu0 0
        %457 = vmatpush1.bf16.msra.mxu0 0
        %458 = vmatprep.subr.bf16.mxu0 0
        %459 = vmatpush1.bf16.msra.mxu0 0
        %460 = vmatprep.subr.bf16.mxu0 0
        %461 = vmatpush1.bf16.msra.mxu0 0
        %462 = vmatprep.subr.bf16.mxu0 0
        %463 = vmatpush1.bf16.msra.mxu0 0
        %464 = vmatprep.subr.bf16.mxu0 0
        %465 = vmatpush1.bf16.msra.mxu0 0
        %466 = vmatprep.subr.bf16.mxu0 0
        %467 = vmatpush1.bf16.msra.mxu0 0
        %468 = vmatprep.subr.bf16.mxu0 0
        %469 = vmatpush1.bf16.msra.mxu0 0
        %470 = vmatprep.subr.bf16.mxu0 0
        %471 = vmatpush1.bf16.msra.mxu0 0
        %472 = vmatprep.subr.bf16.mxu0 0
        %473 = vmatpush1.bf16.msra.mxu0 0
        %474 = vmatprep.subr.bf16.mxu0 0
        %475 = vmatpush1.bf16.msra.mxu0 0
        %476 = vmatprep.subr.bf16.mxu0 0
        %477 = vmatpush1.bf16.msra.mxu0 0
        %478 = vmatprep.mubr.bf16.mxu0 0
        %479 = vmatmul.mubr.bf16.gmra.mrb[0].mxu0 %v444
        %v480 = vpop.f32.mrb[0].mxu0
        %v481 = vadd.f32 %v428, %v480
        %v482 = vpop.f32.mrb[0].mxu0
        %v483 = vpop.f32.mrb[0].mxu0
        %v484 = vpop.f32.mrb[0].mxu0
        %485 = vdwg.mxu0
        %v486 = vpack.c.bf16 %v481, %v481
        %v487 = vld [vmem:[#allocation2] sm:$0xf]
        %vm488 = vcmask 64512
        %v490 = vsel %vm488, %v486, 0
        %v493 = vsel %vm488, %v487, 0
        %495 = vmatprep.subr.bf16.mxu0 0
        %496 = vmatpush1.bf16.xpose.msra.mxu0 %v493
        %497 = vmatprep.subr.bf16.mxu0 0
        %498 = vmatpush1.bf16.xpose.msra.mxu0 0
        %499 = vmatprep.subr.bf16.mxu0 0
        %500 = vmatpush1.bf16.xpose.msra.mxu0 0
        %501 = vmatprep.subr.bf16.mxu0 0
        %502 = vmatpush1.bf16.xpose.msra.mxu0 0
        %503 = vmatprep.subr.bf16.mxu0 0
        %504 = vmatpush1.bf16.xpose.msra.mxu0 0
        %505 = vmatprep.subr.bf16.mxu0 0
        %506 = vmatpush1.bf16.xpose.msra.mxu0 0
        %507 = vmatprep.subr.bf16.mxu0 0
        %508 = vmatpush1.bf16.xpose.msra.mxu0 0
        %509 = vmatprep.subr.bf16.mxu0 0
        %510 = vmatpush1.bf16.xpose.msra.mxu0 0
        %511 = vmatprep.subr.bf16.mxu0 0
        %512 = vmatpush1.bf16.xpose.msra.mxu0 0
        %513 = vmatprep.subr.bf16.mxu0 0
        %514 = vmatpush1.bf16.xpose.msra.mxu0 0
        %515 = vmatprep.subr.bf16.mxu0 0
        %516 = vmatpush1.bf16.xpose.msra.mxu0 0
        %517 = vmatprep.subr.bf16.mxu0 0
        %518 = vmatpush1.bf16.xpose.msra.mxu0 0
        %519 = vmatprep.subr.bf16.mxu0 0
        %520 = vmatpush1.bf16.xpose.msra.mxu0 0
        %521 = vmatprep.subr.bf16.mxu0 0
        %522 = vmatpush1.bf16.xpose.msra.mxu0 0
        %523 = vmatprep.subr.bf16.mxu0 0
        %524 = vmatpush1.bf16.xpose.msra.mxu0 0
        %525 = vmatprep.subr.bf16.mxu0 0
        %526 = vmatpush1.bf16.xpose.msra.mxu0 0
        %527 = vmatprep.mubr.bf16.mxu0 0
        %528 = vmatmul.mubr.bf16.gmra.mrb[0].mxu0 %v490
        %v529 = vpop.f32.mrb[0].mxu0
        %v530 = vadd.f32 0.0, %v529
        %v531 = vpop.f32.mrb[0].mxu0
        %v532 = vpop.f32.mrb[0].mxu0
        %v533 = vpop.f32.mrb[0].mxu0
        %534 = vdwg.mxu0
        %v535 = vsel %vm488, %v530, -inf
        %536 = vmax.xlane.f32.xlu0 %v535
        %v537 = vpop.xlane.xlu0 %536
        %v538 = vsub.f32 %v530, %v537
        %v539 = vmul.f32 %v538, 1.442695
        %v540 = vpow.pop %v539
        %v541 = vsel %vm488, %v540, 0.0
        %542 = vadd.xlane.f32.xlu0 %v541
        %v543 = vpop.xlane.xlu0 %542
        %v544 = vrcp.pop %v543
        %v545 = vmul.f32 %v540, %v544
        %v546 = vpack.c.bf16 %v545, %v545
        %v548 = vunpack.c.l.b16 %v487
        %v549 = vpack.c.b16 %v548, %v548
        %550 = vrot.lane.b32.xlu0 %v549, 96
        %v551 = vpop.permute.xlu0 %550
        %v553 = vsel %vm488, %v546, 0
        %vm555 = vcmask 1043456
        %v557 = vsel %vm555, %v551, 0
        %559 = vmatprep.subr.bf16.mxu0 0
        %560 = vmatpush1.bf16.msra.mxu0 %v557
        %561 = vmatprep.subr.bf16.mxu0 0
        %562 = vmatpush1.bf16.msra.mxu0 0
        %563 = vmatprep.subr.bf16.mxu0 0
        %564 = vmatpush1.bf16.msra.mxu0 0
        %565 = vmatprep.subr.bf16.mxu0 0
        %566 = vmatpush1.bf16.msra.mxu0 0
        %567 = vmatprep.subr.bf16.mxu0 0
        %568 = vmatpush1.bf16.msra.mxu0 0
        %569 = vmatprep.subr.bf16.mxu0 0
        %570 = vmatpush1.bf16.msra.mxu0 0
        %571 = vmatprep.subr.bf16.mxu0 0
        %572 = vmatpush1.bf16.msra.mxu0 0
        %573 = vmatprep.subr.bf16.mxu0 0
        %574 = vmatpush1.bf16.msra.mxu0 0
        %575 = vmatprep.subr.bf16.mxu0 0
        %576 = vmatpush1.bf16.msra.mxu0 0
        %577 = vmatprep.subr.bf16.mxu0 0
        %578 = vmatpush1.bf16.msra.mxu0 0
        %579 = vmatprep.subr.bf16.mxu0 0
        %580 = vmatpush1.bf16.msra.mxu0 0
        %581 = vmatprep.subr.bf16.mxu0 0
        %582 = vmatpush1.bf16.msra.mxu0 0
        %583 = vmatprep.subr.bf16.mxu0 0
        %584 = vmatpush1.bf16.msra.mxu0 0
        %585 = vmatprep.subr.bf16.mxu0 0
        %586 = vmatpush1.bf16.msra.mxu0 0
        %587 = vmatprep.subr.bf16.mxu0 0
        %588 = vmatpush1.bf16.msra.mxu0 0
        %589 = vmatprep.subr.bf16.mxu0 0
        %590 = vmatpush1.bf16.msra.mxu0 0
        %591 = vmatprep.mubr.bf16.mxu0 0
        %592 = vmatmul.mubr.bf16.gmra.mrb[0].mxu0 %v553
        %v593 = vpop.f32.mrb[0].mxu0
        %v594 = vadd.f32 0.0, %v593
        %v595 = vpop.f32.mrb[0].mxu0
        %v596 = vpop.f32.mrb[0].mxu0
        %v597 = vpop.f32.mrb[0].mxu0
        %598 = vdwg.mxu0
        %v599 = vpack.c.bf16 %v594, %v594
        %vm600 = vcmask 60416
        %601 = vst.msk [vmem:[#allocation3] sm:$0xf] %vm600, %v599
        %v602 = vld [vmem:[#allocation2] sm:$0xf]
        %604 = vrot.lane.b32.xlu0 %v486, 120
        %v605 = vpop.permute.xlu0 %604
        %v607 = vunpack.c.l.b16 %v602
        %v608 = vpack.c.b16 %v607, %v607
        %609 = vrot.lane.b32.xlu0 %v608, 120
        %v610 = vpop.permute.xlu0 %609
        %v612 = vsel %vm488, %v605, 0
        %v615 = vsel %vm488, %v610, 0
        %617 = vmatprep.subr.bf16.mxu0 0
        %618 = vmatpush1.bf16.xpose.msra.mxu0 %v615
        %619 = vmatprep.subr.bf16.mxu0 0
        %620 = vmatpush1.bf16.xpose.msra.mxu0 0
        %621 = vmatprep.subr.bf16.mxu0 0
        %622 = vmatpush1.bf16.xpose.msra.mxu0 0
        %623 = vmatprep.subr.bf16.mxu0 0
        %624 = vmatpush1.bf16.xpose.msra.mxu0 0
        %625 = vmatprep.subr.bf16.mxu0 0
        %626 = vmatpush1.bf16.xpose.msra.mxu0 0
        %627 = vmatprep.subr.bf16.mxu0 0
        %628 = vmatpush1.bf16.xpose.msra.mxu0 0
        %629 = vmatprep.subr.bf16.mxu0 0
        %630 = vmatpush1.bf16.xpose.msra.mxu0 0
        %631 = vmatprep.subr.bf16.mxu0 0
        %632 = vmatpush1.bf16.xpose.msra.mxu0 0
        %633 = vmatprep.subr.bf16.mxu0 0
        %634 = vmatpush1.bf16.xpose.msra.mxu0 0
        %635 = vmatprep.subr.bf16.mxu0 0
        %636 = vmatpush1.bf16.xpose.msra.mxu0 0
        %637 = vmatprep.subr.bf16.mxu0 0
        %638 = vmatpush1.bf16.xpose.msra.mxu0 0
        %639 = vmatprep.subr.bf16.mxu0 0
        %640 = vmatpush1.bf16.xpose.msra.mxu0 0
        %641 = vmatprep.subr.bf16.mxu0 0
        %642 = vmatpush1.bf16.xpose.msra.mxu0 0
        %643 = vmatprep.subr.bf16.mxu0 0
        %644 = vmatpush1.bf16.xpose.msra.mxu0 0
        %645 = vmatprep.subr.bf16.mxu0 0
        %646 = vmatpush1.bf16.xpose.msra.mxu0 0
        %647 = vmatprep.subr.bf16.mxu0 0
        %648 = vmatpush1.bf16.xpose.msra.mxu0 0
        %649 = vmatprep.mubr.bf16.mxu0 0
        %650 = vmatmul.mubr.bf16.gmra.mrb[0].mxu0 %v612
        %v651 = vpop.f32.mrb[0].mxu0
        %v652 = vadd.f32 0.0, %v651
        %v653 = vpop.f32.mrb[0].mxu0
        %v654 = vpop.f32.mrb[0].mxu0
        %v655 = vpop.f32.mrb[0].mxu0
        %656 = vdwg.mxu0
        %v657 = vsel %vm488, %v652, -inf
        %658 = vmax.xlane.f32.xlu0 %v657
        %v659 = vpop.xlane.xlu0 %658
        %v660 = vsub.f32 %v652, %v659
        %v661 = vmul.f32 %v660, 1.442695
        %v662 = vpow.pop %v661
        %v663 = vsel %vm488, %v662, 0.0
        %664 = vadd.xlane.f32.xlu0 %v663
        %v665 = vpop.xlane.xlu0 %664
        %v666 = vrcp.pop %v665
        %v667 = vmul.f32 %v662, %v666
        %v668 = vpack.c.bf16 %v667, %v667
        %669 = vrot.lane.b32.xlu0 %v608, 88
        %v670 = vpop.permute.xlu0 %669
        %v672 = vsel %vm488, %v668, 0
        %v675 = vsel %vm555, %v670, 0
        %677 = vmatprep.subr.bf16.mxu0 0
        %678 = vmatpush1.bf16.msra.mxu0 %v675
        %679 = vmatprep.subr.bf16.mxu0 0
        %680 = vmatpush1.bf16.msra.mxu0 0
        %681 = vmatprep.subr.bf16.mxu0 0
        %682 = vmatpush1.bf16.msra.mxu0 0
        %683 = vmatprep.subr.bf16.mxu0 0
        %684 = vmatpush1.bf16.msra.mxu0 0
        %685 = vmatprep.subr.bf16.mxu0 0
        %686 = vmatpush1.bf16.msra.mxu0 0
        %687 = vmatprep.subr.bf16.mxu0 0
        %688 = vmatpush1.bf16.msra.mxu0 0
        %689 = vmatprep.subr.bf16.mxu0 0
        %690 = vmatpush1.bf16.msra.mxu0 0
        %691 = vmatprep.subr.bf16.mxu0 0
        %692 = vmatpush1.bf16.msra.mxu0 0
        %693 = vmatprep.subr.bf16.mxu0 0
        %694 = vmatpush1.bf16.msra.mxu0 0
        %695 = vmatprep.subr.bf16.mxu0 0
        %696 = vmatpush1.bf16.msra.mxu0 0
        %697 = vmatprep.subr.bf16.mxu0 0
        %698 = vmatpush1.bf16.msra.mxu0 0
        %699 = vmatprep.subr.bf16.mxu0 0
        %700 = vmatpush1.bf16.msra.mxu0 0
        %701 = vmatprep.subr.bf16.mxu0 0
        %702 = vmatpush1.bf16.msra.mxu0 0
        %703 = vmatprep.subr.bf16.mxu0 0
        %704 = vmatpush1.bf16.msra.mxu0 0
        %705 = vmatprep.subr.bf16.mxu0 0
        %706 = vmatpush1.bf16.msra.mxu0 0
        %707 = vmatprep.subr.bf16.mxu0 0
        %708 = vmatpush1.bf16.msra.mxu0 0
        %709 = vmatprep.mubr.bf16.mxu0 0
        %710 = vmatmul.mubr.bf16.gmra.mrb[0].mxu0 %v672
        %v711 = vpop.f32.mrb[0].mxu0
        %v712 = vadd.f32 0.0, %v711
        %v713 = vpop.f32.mrb[0].mxu0
        %v714 = vpop.f32.mrb[0].mxu0
        %v715 = vpop.f32.mrb[0].mxu0
        %716 = vdwg.mxu0
        %v717 = vpack.c.bf16 %v712, %v712
        %v719 = vunpack.c.l.b16 %v717
        %v720 = vpack.c.b16 %v719, %v719
        %721 = vrot.lane.b32.xlu0 %v720, 8
        %v722 = vpop.permute.xlu0 %721
        %vm724 = vcmask 126016
        %725 = vst.msk [vmem:[#allocation3] sm:$0xf] %vm724, %v722
        %v726 = vld [vmem:[#allocation2] sm:$0xf]
        %727 = vrot.lane.b32.xlu0 %v486, 112
        %v728 = vpop.permute.xlu0 %727
        %v730 = vunpack.c.l.b16 %v726
        %v731 = vpack.c.b16 %v730, %v730
        %732 = vrot.lane.b32.xlu0 %v731, 112
        %v733 = vpop.permute.xlu0 %732
        %v735 = vsel %vm488, %v728, 0
        %v738 = vsel %vm488, %v733, 0
        %740 = vmatprep.subr.bf16.mxu0 0
        %741 = vmatpush1.bf16.xpose.msra.mxu0 %v738
        %742 = vmatprep.subr.bf16.mxu0 0
        %743 = vmatpush1.bf16.xpose.msra.mxu0 0
        %744 = vmatprep.subr.bf16.mxu0 0
        %745 = vmatpush1.bf16.xpose.msra.mxu0 0
        %746 = vmatprep.subr.bf16.mxu0 0
        %747 = vmatpush1.bf16.xpose.msra.mxu0 0
        %748 = vmatprep.subr.bf16.mxu0 0
        %749 = vmatpush1.bf16.xpose.msra.mxu0 0
        %750 = vmatprep.subr.bf16.mxu0 0
        %751 = vmatpush1.bf16.xpose.msra.mxu0 0
        %752 = vmatprep.subr.bf16.mxu0 0
        %753 = vmatpush1.bf16.xpose.msra.mxu0 0
        %754 = vmatprep.subr.bf16.mxu0 0
        %755 = vmatpush1.bf16.xpose.msra.mxu0 0
        %756 = vmatprep.subr.bf16.mxu0 0
        %757 = vmatpush1.bf16.xpose.msra.mxu0 0
        %758 = vmatprep.subr.bf16.mxu0 0
        %759 = vmatpush1.bf16.xpose.msra.mxu0 0
        %760 = vmatprep.subr.bf16.mxu0 0
        %761 = vmatpush1.bf16.xpose.msra.mxu0 0
        %762 = vmatprep.subr.bf16.mxu0 0
        %763 = vmatpush1.bf16.xpose.msra.mxu0 0
        %764 = vmatprep.subr.bf16.mxu0 0
        %765 = vmatpush1.bf16.xpose.msra.mxu0 0
        %766 = vmatprep.subr.bf16.mxu0 0
        %767 = vmatpush1.bf16.xpose.msra.mxu0 0
        %768 = vmatprep.subr.bf16.mxu0 0
        %769 = vmatpush1.bf16.xpose.msra.mxu0 0
        %770 = vmatprep.subr.bf16.mxu0 0
        %771 = vmatpush1.bf16.xpose.msra.mxu0 0
        %772 = vmatprep.mubr.bf16.mxu0 0
        %773 = vmatmul.mubr.bf16.gmra.mrb[0].mxu0 %v735
        %v774 = vpop.f32.mrb[0].mxu0
        %v775 = vadd.f32 0.0, %v774
        %v776 = vpop.f32.mrb[0].mxu0
        %v777 = vpop.f32.mrb[0].mxu0
        %v778 = vpop.f32.mrb[0].mxu0
        %779 = vdwg.mxu0
        %v780 = vsel %vm488, %v775, -inf
        %781 = vmax.xlane.f32.xlu0 %v780
        %v782 = vpop.xlane.xlu0 %781
        %v783 = vsub.f32 %v775, %v782
        %v784 = vmul.f32 %v783, 1.442695
        %v785 = vpow.pop %v784
        %v786 = vsel %vm488, %v785, 0.0
        %787 = vadd.xlane.f32.xlu0 %v786
        %v788 = vpop.xlane.xlu0 %787
        %v789 = vrcp.pop %v788
        %v790 = vmul.f32 %v785, %v789
        %v791 = vpack.c.bf16 %v790, %v790
        %792 = vrot.lane.b32.xlu0 %v731, 80
        %v793 = vpop.permute.xlu0 %792
        %v795 = vsel %vm488, %v791, 0
        %v798 = vsel %vm555, %v793, 0
        %800 = vmatprep.subr.bf16.mxu0 0
        %801 = vmatpush1.bf16.msra.mxu0 %v798
        %802 = vmatprep.subr.bf16.mxu0 0
        %803 = vmatpush1.bf16.msra.mxu0 0
        %804 = vmatprep.subr.bf16.mxu0 0
        %805 = vmatpush1.bf16.msra.mxu0 0
        %806 = vmatprep.subr.bf16.mxu0 0
        %807 = vmatpush1.bf16.msra.mxu0 0
        %808 = vmatprep.subr.bf16.mxu0 0
        %809 = vmatpush1.bf16.msra.mxu0 0
        %810 = vmatprep.subr.bf16.mxu0 0
        %811 = vmatpush1.bf16.msra.mxu0 0
        %812 = vmatprep.subr.bf16.mxu0 0
        %813 = vmatpush1.bf16.msra.mxu0 0
        %814 = vmatprep.subr.bf16.mxu0 0
        %815 = vmatpush1.bf16.msra.mxu0 0
        %816 = vmatprep.subr.bf16.mxu0 0
        %817 = vmatpush1.bf16.msra.mxu0 0
        %818 = vmatprep.subr.bf16.mxu0 0
        %819 = vmatpush1.bf16.msra.mxu0 0
        %820 = vmatprep.subr.bf16.mxu0 0
        %821 = vmatpush1.bf16.msra.mxu0 0
        %822 = vmatprep.subr.bf16.mxu0 0
        %823 = vmatpush1.bf16.msra.mxu0 0
        %824 = vmatprep.subr.bf16.mxu0 0
        %825 = vmatpush1.bf16.msra.mxu0 0
        %826 = vmatprep.subr.bf16.mxu0 0
        %827 = vmatpush1.bf16.msra.mxu0 0
        %828 = vmatprep.subr.bf16.mxu0 0
        %829 = vmatpush1.bf16.msra.mxu0 0
        %830 = vmatprep.subr.bf16.mxu0 0
        %831 = vmatpush1.bf16.msra.mxu0 0
        %832 = vmatprep.mubr.bf16.mxu0 0
        %833 = vmatmul.mubr.bf16.gmra.mrb[0].mxu0 %v795
        %v834 = vpop.f32.mrb[0].mxu0
        %v835 = vadd.f32 0.0, %v834
        %v836 = vpop.f32.mrb[0].mxu0
        %v837 = vpop.f32.mrb[0].mxu0
        %v838 = vpop.f32.mrb[0].mxu0
        %839 = vdwg.mxu0
        %v840 = vpack.c.bf16 %v835, %v835
        %v842 = vunpack.c.l.b16 %v840
        %v843 = vpack.c.b16 %v842, %v842
        %844 = vrot.lane.b32.xlu0 %v843, 16
        %v845 = vpop.permute.xlu0 %844
        %vm847 = vcmask 191616
        %848 = vst.msk [vmem:[#allocation3] sm:$0xf] %vm847, %v845
        %v849 = vld [vmem:[#allocation2] sm:$0xf]
        %850 = vrot.lane.b32.xlu0 %v486, 104
        %v851 = vpop.permute.xlu0 %850
        %v853 = vunpack.c.l.b16 %v849
        %v854 = vpack.c.b16 %v853, %v853
        %855 = vrot.lane.b32.xlu0 %v854, 104
        %v856 = vpop.permute.xlu0 %855
        %v858 = vsel %vm488, %v851, 0
        %v861 = vsel %vm488, %v856, 0
        %863 = vmatprep.subr.bf16.mxu0 0
        %864 = vmatpush1.bf16.xpose.msra.mxu0 %v861
        %865 = vmatprep.subr.bf16.mxu0 0
        %866 = vmatpush1.bf16.xpose.msra.mxu0 0
        %867 = vmatprep.subr.bf16.mxu0 0
        %868 = vmatpush1.bf16.xpose.msra.mxu0 0
        %869 = vmatprep.subr.bf16.mxu0 0
        %870 = vmatpush1.bf16.xpose.msra.mxu0 0
        %871 = vmatprep.subr.bf16.mxu0 0
        %872 = vmatpush1.bf16.xpose.msra.mxu0 0
        %873 = vmatprep.subr.bf16.mxu0 0
        %874 = vmatpush1.bf16.xpose.msra.mxu0 0
        %875 = vmatprep.subr.bf16.mxu0 0
        %876 = vmatpush1.bf16.xpose.msra.mxu0 0
        %877 = vmatprep.subr.bf16.mxu0 0
        %878 = vmatpush1.bf16.xpose.msra.mxu0 0
        %879 = vmatprep.subr.bf16.mxu0 0
        %880 = vmatpush1.bf16.xpose.msra.mxu0 0
        %881 = vmatprep.subr.bf16.mxu0 0
        %882 = vmatpush1.bf16.xpose.msra.mxu0 0
        %883 = vmatprep.subr.bf16.mxu0 0
        %884 = vmatpush1.bf16.xpose.msra.mxu0 0
        %885 = vmatprep.subr.bf16.mxu0 0
        %886 = vmatpush1.bf16.xpose.msra.mxu0 0
        %887 = vmatprep.subr.bf16.mxu0 0
        %888 = vmatpush1.bf16.xpose.msra.mxu0 0
        %889 = vmatprep.subr.bf16.mxu0 0
        %890 = vmatpush1.bf16.xpose.msra.mxu0 0
        %891 = vmatprep.subr.bf16.mxu0 0
        %892 = vmatpush1.bf16.xpose.msra.mxu0 0
        %893 = vmatprep.subr.bf16.mxu0 0
        %894 = vmatpush1.bf16.xpose.msra.mxu0 0
        %895 = vmatprep.mubr.bf16.mxu0 0
        %896 = vmatmul.mubr.bf16.gmra.mrb[0].mxu0 %v858
        %v897 = vpop.f32.mrb[0].mxu0
        %v898 = vadd.f32 0.0, %v897
        %v899 = vpop.f32.mrb[0].mxu0
        %v900 = vpop.f32.mrb[0].mxu0
        %v901 = vpop.f32.mrb[0].mxu0
        %902 = vdwg.mxu0
        %v903 = vsel %vm488, %v898, -inf
        %904 = vmax.xlane.f32.xlu0 %v903
        %v905 = vpop.xlane.xlu0 %904
        %v906 = vsub.f32 %v898, %v905
        %v907 = vmul.f32 %v906, 1.442695
        %v908 = vpow.pop %v907
        %v909 = vsel %vm488, %v908, 0.0
        %910 = vadd.xlane.f32.xlu0 %v909
        %v911 = vpop.xlane.xlu0 %910
        %v912 = vrcp.pop %v911
        %v913 = vmul.f32 %v908, %v912
        %v914 = vpack.c.bf16 %v913, %v913
        %915 = vrot.lane.b32.xlu0 %v854, 72
        %v916 = vpop.permute.xlu0 %915
        %v918 = vsel %vm488, %v914, 0
        %v921 = vsel %vm555, %v916, 0
        %923 = vmatprep.subr.bf16.mxu0 0
        %924 = vmatpush1.bf16.msra.mxu0 %v921
        %925 = vmatprep.subr.bf16.mxu0 0
        %926 = vmatpush1.bf16.msra.mxu0 0
        %927 = vmatprep.subr.bf16.mxu0 0
        %928 = vmatpush1.bf16.msra.mxu0 0
        %929 = vmatprep.subr.bf16.mxu0 0
        %930 = vmatpush1.bf16.msra.mxu0 0
        %931 = vmatprep.subr.bf16.mxu0 0
        %932 = vmatpush1.bf16.msra.mxu0 0
        %933 = vmatprep.subr.bf16.mxu0 0
        %934 = vmatpush1.bf16.msra.mxu0 0
        %935 = vmatprep.subr.bf16.mxu0 0
        %936 = vmatpush1.bf16.msra.mxu0 0
        %937 = vmatprep.subr.bf16.mxu0 0
        %938 = vmatpush1.bf16.msra.mxu0 0
        %939 = vmatprep.subr.bf16.mxu0 0
        %940 = vmatpush1.bf16.msra.mxu0 0
        %941 = vmatprep.subr.bf16.mxu0 0
        %942 = vmatpush1.bf16.msra.mxu0 0
        %943 = vmatprep.subr.bf16.mxu0 0
        %944 = vmatpush1.bf16.msra.mxu0 0
        %945 = vmatprep.subr.bf16.mxu0 0
        %946 = vmatpush1.bf16.msra.mxu0 0
        %947 = vmatprep.subr.bf16.mxu0 0
        %948 = vmatpush1.bf16.msra.mxu0 0
        %949 = vmatprep.subr.bf16.mxu0 0
        %950 = vmatpush1.bf16.msra.mxu0 0
        %951 = vmatprep.subr.bf16.mxu0 0
        %952 = vmatpush1.bf16.msra.mxu0 0
        %953 = vmatprep.subr.bf16.mxu0 0
        %954 = vmatpush1.bf16.msra.mxu0 0
        %955 = vmatprep.mubr.bf16.mxu0 0
        %956 = vmatmul.mubr.bf16.gmra.mrb[0].mxu0 %v918
        %v957 = vpop.f32.mrb[0].mxu0
        %v958 = vadd.f32 0.0, %v957
        %v959 = vpop.f32.mrb[0].mxu0
        %v960 = vpop.f32.mrb[0].mxu0
        %v961 = vpop.f32.mrb[0].mxu0
        %962 = vdwg.mxu0
        %v963 = vpack.c.bf16 %v958, %v958
        %v965 = vunpack.c.l.b16 %v963
        %v966 = vpack.c.b16 %v965, %v965
        %967 = vrot.lane.b32.xlu0 %v966, 24
        %v968 = vpop.permute.xlu0 %967
        %vm970 = vcmask 257216
        %971 = vst.msk [vmem:[#allocation3] sm:$0xf] %vm970, %v968
        %v972 = vld [vmem:[#allocation3] sm:$0xf]
        %v973 = vld [vmem:[%s5] sm:$0xf]
        %v974 = vld [vmem:[%s5 + $0x4] sm:$0xf]
        %v975 = vld [vmem:[%s5 + $0x8] sm:$0xf]
        %v976 = vld [vmem:[%s5 + $0xc] sm:$0xf]
        %v977 = vld [vmem:[%s6] sm:$0x1]
        %v979 = vlaneseq
        %v980 = vshrl.u32 %v979, 7
        %v981 = vsub.s32 0, %v980
        %v982 = vrot.slane %v977, %v981
        %v988 = vunpack.c.l.b16 %v973
        %v989 = vunpack.c.l.b16 %v974
        %v990 = vunpack.c.l.b16 %v975
        %v991 = vunpack.c.l.b16 %v976
        %v992 = vpack.c.b16 %v989, %v988
        %v993 = vpack.c.b16 %v991, %v990
        %v997 = vsel %vm442, %v972, 0
        %999 = vmatprep.subr.bf16.mxu0 0
        %1000 = vmatpush1.bf16.msra.mxu0 %v992
        %1001 = vmatprep.subr.bf16.mxu0 0
        %1002 = vmatpush1.bf16.msra.mxu0 %v993
        %1003 = vmatprep.subr.bf16.mxu0 0
        %1004 = vmatpush1.bf16.msra.mxu0 0
        %1005 = vmatprep.subr.bf16.mxu0 0
        %1006 = vmatpush1.bf16.msra.mxu0 0
        %1007 = vmatprep.subr.bf16.mxu0 0
        %1008 = vmatpush1.bf16.msra.mxu0 0
        %1009 = vmatprep.subr.bf16.mxu0 0
        %1010 = vmatpush1.bf16.msra.mxu0 0
        %1011 = vmatprep.subr.bf16.mxu0 0
        %1012 = vmatpush1.bf16.msra.mxu0 0
        %1013 = vmatprep.subr.bf16.mxu0 0
        %1014 = vmatpush1.bf16.msra.mxu0 0
        %1015 = vmatprep.subr.bf16.mxu0 0
        %1016 = vmatpush1.bf16.msra.mxu0 0
        %1017 = vmatprep.subr.bf16.mxu0 0
        %1018 = vmatpush1.bf16.msra.mxu0 0
        %1019 = vmatprep.subr.bf16.mxu0 0
        %1020 = vmatpush1.bf16.msra.mxu0 0
        %1021 = vmatprep.subr.bf16.mxu0 0
        %1022 = vmatpush1.bf16.msra.mxu0 0
        %1023 = vmatprep.subr.bf16.mxu0 0
        %1024 = vmatpush1.bf16.msra.mxu0 0
        %1025 = vmatprep.subr.bf16.mxu0 0
        %1026 = vmatpush1.bf16.msra.mxu0 0
        %1027 = vmatprep.subr.bf16.mxu0 0
        %1028 = vmatpush1.bf16.msra.mxu0 0
        %1029 = vmatprep.subr.bf16.mxu0 0
        %1030 = vmatpush1.bf16.msra.mxu0 0
        %1031 = vmatprep.mubr.bf16.mxu0 0
        %1032 = vmatmul.mubr.bf16.gmra.mrb[0].mxu0 %v997
        %v1033 = vpop.f32.mrb[0].mxu0
        %v1034 = vadd.f32 %v982, %v1033
        %v1035 = vpop.f32.mrb[0].mxu0
        %v1036 = vpop.f32.mrb[0].mxu0
        %v1037 = vpop.f32.mrb[0].mxu0
        %1038 = vdwg.mxu0
        %1039 = vst.msk [vmem:[%s336] sm:$0xff] %vm442, %v1034
        %s1040 = sand.u32 %s199, 1
        %s1041 = scalar_lea.sflag [#allocation6], %s1040
        %s1042 = sand.u32 %s199, 1
        %s1043 = smul.addr %s1042, 8
        %s1044 = scalar_lea.vmem [#allocation10], %s1043
        // Predicated region
        $region65: #{tpu_custom_call.1} parent=47 // pred_check
          %p1045 = pneg %p209
        $region66: #{tpu_custom_call.1} parent=47 // pred_check_branch
          %1047 = sbr.rel (%p1045) target = $region68
        $region67: #{tpu_custom_call.1} parent=47 // pred_region
          %s1049 = ssub.s32 128, 128
          %1050 = vsyncadd %s1041, %s1049
          %s1051 = sadd.s32 %s30, %s29
          %s1052 = smul.addr %s1051, 128
          %s1053 = scalar_lea.hbm %s7, %s1052
          %s1055 = sshll.u32 %s1044, 4
          %s1056 = int_to_ptr.vmem [resolvable:$true] %s1055
          %1058 = dma.vmem_to_hbm [thread:$0]  %s1056, 128, %s1053, %s1041
        $region68: #{tpu_custom_call.1} parent=47 // pred_fallthru
          _
      $region48: #{tpu_custom_call.1} parent=5 // pred_fallthru
        _
      %p1059 = scmp.le.s32.totalorder 2, %s20
      // Predicated region
      $region69: #{tpu_custom_call.1} parent=5 // pred_check
        %p1060 = pneg %p1059
      $region70: #{tpu_custom_call.1} parent=5 // pred_check_branch
        %1062 = sbr.rel (%p1060) target = $region72
      $region71: #{tpu_custom_call.1} parent=5 // pred_region
        %s1063 = ssub.s32 %s20, 2
        // Predicated region
        $region73: #{tpu_custom_call.1} parent=71 // pred_check
          %p1064 = pneg %p215
        $region74: #{tpu_custom_call.1} parent=71 // pred_check_branch
          %1066 = sbr.rel (%p1064) target = $region76
        $region75: #{tpu_custom_call.1} parent=71 // pred_region
          %s1067 = sand.u32 %s200, 1
          %s1068 = scalar_lea.sflag [#allocation6], %s1067
          %s1069 = sand.u32 %s200, 1
          %s1070 = smul.addr %s1069, 8
          %s1071 = scalar_lea.vmem [#allocation10], %s1070
          %1072 = dma.done %s1068, 128
        $region76: #{tpu_custom_call.1} parent=71 // pred_fallthru
          _
      $region72: #{tpu_custom_call.1} parent=5 // pred_fallthru
        _
    $region6: #{tpu_custom_call.1} parent=1 // loop_footer
      %s24 = sadd.s32 1, %s20
    $region7: #{tpu_custom_call.1} parent=1 // loop_footer_branch
      %19 = sbr.rel target = $region3
    $region8: #{tpu_custom_call.1} parent=1 // loop_exit
      _
    %1073 = vsyncpa [#allocation5], 1
    %s1074 = scalar_lea.sflag [#allocation5], 1
    %1075 = vsyncpa %s1074, 1
    %1076 = vsyncpa [#allocation8], 1
    %1077 = vsyncpa [#allocation6], 1
    %s1078 = scalar_lea.sflag [#allocation6], 1
    %1079 = vsyncpa %s1078, 1

</llo_original>
